<compile_context>
chip_gen: v6e
topology: v6e:2x2x1
jax: 0.10.0
libtpu: 0.0.40
codegen_flags: <defaults>
</compile_context>

<pallas_src>
import functools

import jax
import jax.numpy as jnp
from jax import lax
from jax.experimental import pallas as pl
from jax.experimental.pallas import tpu as pltpu

# Contract the LAST axis of both operands: X:(tm,tk) x W:(tn,tk) -> (tm,tn).
# Same dimension numbers the TPU flash-attention kernel uses for q @ k^T;
# lowers to an MXU matmul with a folded rhs transpose (no XLU relayout).
_TRANS_B_DIMS = (((1,), (1,)), ((), ()))

# Whole-problem (single-block) fast path threshold: bf16 X + bf16 W + f32 out,
# single-buffered.  Kept well under v5e's 16 MiB default scoped VMEM.
_FAST_PATH_BYTES = 8 * 1024 * 1024


def _round_up(x, m):
    return ((x + m - 1) // m) * m


def _cdiv(a, b):
    return -(-a // b)


def _tiled_kernel(x_ref, w_ref, o_ref):
    # grid = (M tiles, N tiles, P tiles); P (=K) reduction axis is LAST, so the
    # (tm, tn) f32 output tile stays resident and we accumulate into it.
    @pl.when(pl.program_id(2) == 0)
    def _():
        o_ref[...] = jnp.zeros_like(o_ref)

    o_ref[...] += lax.dot_general(
        x_ref[...], w_ref[...], _TRANS_B_DIMS,
        preferred_element_type=jnp.float32,
    )


def _single_block_kernel(x_ref, w_ref, o_ref):
    # Whole problem in VMEM: one MXU contraction, no init/accumulate needed.
    o_ref[...] = lax.dot_general(
        x_ref[...], w_ref[...], _TRANS_B_DIMS,
        preferred_element_type=jnp.float32,
    )


@functools.partial(
    jax.jit,
    static_argnames=("tm_cap", "tn_cap", "tk_cap", "use_bf16", "force_tiled"),
)
def plants_linear_forward(x, w, *, tm_cap=256, tn_cap=512, tk_cap=2048,
                          use_bf16=True, force_tiled=False):
    """pred = x @ w.T  (equivalent to torch nn.Linear(P, N, bias=False))."""
    M, P = x.shape
    N, P2 = w.shape
    if P != P2:
        raise ValueError(f"in_features mismatch: x has {P}, w has {P2}")

    out_dtype = x.dtype
    in_dtype = jnp.bfloat16 if use_bf16 else x.dtype
    itemsize = jnp.dtype(in_dtype).itemsize

    xc = x.astype(in_dtype)
    wc = w.astype(in_dtype)

    # ------------------------------------------------------------------ fast
    # Whole problem fits in VMEM: gridless single block, full-array BlockSpecs
    # (bypasses the (8,128) divisibility rule), no padding, no output slice.
    footprint = itemsize * (M * P + N * P) + 4 * M * N
    if (not force_tiled) and footprint <= _FAST_PATH_BYTES:
        out = pl.pallas_call(
            _single_block_kernel,
            out_shape=jax.ShapeDtypeStruct((M, N), jnp.float32),
            in_specs=[
                pl.BlockSpec(memory_space=pltpu.MemorySpace.VMEM),
                pl.BlockSpec(memory_space=pltpu.MemorySpace.VMEM),
            ],
            out_specs=pl.BlockSpec(memory_space=pltpu.MemorySpace.VMEM),
        )(xc, wc)
        return out.astype(out_dtype)

    # ----------------------------------------------------------------- tiled
    # Pick tile COUNTS first, then tile sizes rounded to (8, 128) alignment,
    # so padding never rounds a dimension up to a full capped tile.
    nt_m = _cdiv(_round_up(M, 8), tm_cap)
    tm = _round_up(_cdiv(M, nt_m), 8)

    nt_n = _cdiv(_round_up(N, 128), tn_cap)
    # v7x has 2 TensorCores: if the (i, j) grid would degenerate to a single
    # block, split N into two j-tiles so both cores get parallel work.
    if nt_m == 1 and nt_n == 1 and _round_up(N, 128) >= 256:
        nt_n = 2
    tn = _round_up(_cdiv(N, nt_n), 128)

    nt_k = _cdiv(_round_up(P, 128), tk_cap)
    tk = _round_up(_cdiv(P, nt_k), 128)

    Mp, Np, Pp = nt_m * tm, nt_n * tn, nt_k * tk

    # Minimal zero-padding (<=7 rows / <=127 cols per axis); zeros contribute
    # nothing to the contraction and padded output rows/cols are sliced away.
    xp = xc if (Mp == M and Pp == P) else jnp.pad(xc, ((0, Mp - M), (0, Pp - P)))
    wp = wc if (Np == N and Pp == P) else jnp.pad(wc, ((0, Np - N), (0, Pp - P)))

    grid = (nt_m, nt_n, nt_k)

    # VMEM at the caps (bf16): X 1 MiB + W 2 MiB double-buffered + O 0.5 MiB
    # f32 double-buffered ~= 7 MiB -> fits default scoped VMEM on all gens.
    out = pl.pallas_call(
        _tiled_kernel,
        out_shape=jax.ShapeDtypeStruct((Mp, Np), jnp.float32),
        grid_spec=pltpu.PrefetchScalarGridSpec(
            num_scalar_prefetch=0,
            grid=grid,
            in_specs=[
                pl.BlockSpec((tm, tk), lambda i, j, k: (i, k)),  # X tile
                pl.BlockSpec((tn, tk), lambda i, j, k: (j, k)),  # W tile (N,P)
            ],
            out_specs=pl.BlockSpec((tm, tn), lambda i, j, k: (i, j)),
        ),
        compiler_params=pltpu.CompilerParams(
            dimension_semantics=("parallel", "parallel", "arbitrary"),
        ),
        cost_estimate=pl.CostEstimate(
            flops=2 * Mp * Np * Pp,
            transcendentals=0,
            bytes_accessed=itemsize * (Mp * Pp + Np * Pp) + 4 * Mp * Np,
        ),
    )(xp, wp)

    if Mp != M or Np != N:
        out = out[:M, :N]
    return out.astype(out_dtype)


def init_plants_linear_weight(key, num_units, num_plants, init_positive=False):
    """Replica of PlantsLinearModel.__init__ weight init.

    Default nn.Linear init: U(-1/sqrt(P), 1/sqrt(P)).
    init_positive=True:     U(0.01/sqrt(P), 1/sqrt(P)).
    """
    stdv = 1.0 / jnp.sqrt(jnp.float32(num_plants))
    if init_positive:
        lo, hi = 0.01 * stdv, stdv
    else:
        lo, hi = -stdv, stdv
    return jax.random.uniform(
        key, (num_units, num_plants), dtype=jnp.float32, minval=lo, maxval=hi
    )


if __name__ == "__main__":
    # Small shapes consistent with the module; deliberately NOT multiples of
    # 128 to exercise the non-aligned / padding paths.
    #   num_plants P = 300 (in_features), num_units N = 200 (out_features),
    #   batch of M = 64 observations.
    M, P, N = 64, 300, 200

    key = jax.random.PRNGKey(0)
    k_x, k_w = jax.random.split(key)

    X = jax.random.normal(k_x, (M, P), dtype=jnp.float32)
    W = init_plants_linear_weight(k_w, num_units=N, num_plants=P,
                                  init_positive=True)

    # Fast (single-block) path — what this shape actually uses.
    pred = jax.block_until_ready(plants_linear_forward(X, W))
    # Tiled path, forced, to exercise padding / grid / accumulation too.
    pred_tiled = jax.block_until_ready(plants_linear_forward(X, W,
                                                             force_tiled=True))

    # Reference matching the in-kernel numerics: bf16 operands, f32 accumulate.
    ref_bf16 = jnp.dot(X.astype(jnp.bfloat16), W.astype(jnp.bfloat16).T,
                       preferred_element_type=jnp.float32)
    ref_f32 = X @ W.T

    assert pred.shape == (M, N)
    assert pred_tiled.shape == (M, N)
    assert jnp.allclose(pred, ref_bf16, atol=1e-3, rtol=1e-3)
    assert jnp.allclose(pred_tiled, ref_bf16, atol=1e-3, rtol=1e-3)
    # Loose check against the full-f32 reference (bf16 input quantization).
    assert jnp.allclose(pred, ref_f32, atol=5e-2, rtol=5e-2)

    # TODO(synk): tv_loss / shrink_loss / log_barrier / gravity_penalty /
    # clamp_weights are training-time regularizers, not part of forward();
    # not implemented here.
    print("KERNEL_OK")
</pallas_src>

<mosaic_0001>
module attributes {stable_mosaic.version = 11 : i64} {
  func.func @_single_block_kernel(%arg0: memref<64x300xbf16, #tpu.memory_space<vmem>>, %arg1: memref<200x300xbf16, #tpu.memory_space<vmem>>, %arg2: memref<64x200xf32, #tpu.memory_space<vmem>>) attributes {dimension_semantics = [], scalar_prefetch = 0 : i64, scratch_operands = 0 : i64, tpu.core_type = #tpu.core_type<tc>} {
    %c0 = arith.constant 0 : index
    %c0_0 = arith.constant 0 : index
    %0 = vector.load %arg0[%c0, %c0_0] : memref<64x300xbf16, #tpu.memory_space<vmem>>, vector<64x300xbf16>
    %c0_1 = arith.constant 0 : index
    %c0_2 = arith.constant 0 : index
    %1 = vector.load %arg1[%c0_1, %c0_2] : memref<200x300xbf16, #tpu.memory_space<vmem>>, vector<200x300xbf16>
    %cst = arith.constant dense<0.000000e+00> : vector<64x200xf32>
    %2 = tpu.matmul %0, %1, %cst {dimension_numbers = #tpu.dot_dimension_numbers<[1], [1], [0], [0], [0, 0, 1, 0], [], []>} : vector<64x300xbf16>, vector<200x300xbf16>, vector<64x200xf32> -> vector<64x200xf32>
    %c0_3 = arith.constant 0 : index
    %c0_4 = arith.constant 0 : index
    %3 = vector.load %arg2[%c0_3, %c0_4] : memref<64x200xf32, #tpu.memory_space<vmem>>, vector<64x200xf32>
    tpu.vector_store %arg2[%c0_3, %c0_4], %2 {strides = array<i32>} : memref<64x200xf32, #tpu.memory_space<vmem>>, vector<64x200xf32>,
    return
  }
}

</mosaic_0001>

<llo_original>
// kernel: plants_linear_forward.1
$region0: #{plants_linear_forward.1}
  #allocation0 [shape = 'u32[]', space=smem, size = 0x4, offset = 0x4, fixed_abs, tag = 'smem constant byte address 0x4 - core index']
  #allocation1 [shape = 'u32[144,128]{1,0:T(1,128)}', space=vmem, size = 0x12000, scoped, tag = 'internal scratch']
  %s0 = inlined_call_operand.vmem [shape: bf16[64,300], index: 0, kind: input, shape index: {}]
  %s1 = inlined_call_operand.vmem [shape: bf16[200,300], index: 1, kind: input, shape index: {}]
  %s2 = inlined_call_operand.hbm [shape: f32[64,200], index: 2, kind: output, shape index: {}]
  %s3 = sld [smem:[#allocation0]]
  $region18: #{plants_linear_forward.1} parent=0
    _
  %s5 = ssub.s32 1, %s3
  %s6 = scalar_select 0, %s5, %s3
  $region1: #{plants_linear_forward.1} parent=0
    #allocation2 [shape = 'u8[65536]{0}', space=vmem, size = 0x10000, scoped, tag = 'output window, operand 0, single buffered']
    #allocation3 [shape = 's32[1]{0}', space=sflag, size = 0x4, scoped, tag = 'scoped memory for plants_linear_forward.1']
    %7 = vsyncpa [#allocation3], 0
    // Predicated region
    $region2: #{plants_linear_forward.1} parent=1 // pred_check
      _
    $region3: #{plants_linear_forward.1} parent=1 // pred_check_branch
      %9 = sbr.rel (0) target = $region5
    $region4: #{plants_linear_forward.1} parent=1 // pred_region
      _
    $region5: #{plants_linear_forward.1} parent=1 // pred_fallthru
      _
    // Predicated region
    $region6: #{plants_linear_forward.1} parent=1 // pred_check
      _
    $region7: #{plants_linear_forward.1} parent=1 // pred_check_branch
      %11 = sbr.rel (0) target = $region9
    $region8: #{plants_linear_forward.1} parent=1 // pred_region
      _
    $region9: #{plants_linear_forward.1} parent=1 // pred_fallthru
      _
    %v13 = vld [vmem:[%s0] sm:$0xff]
    %v14 = vld [vmem:[%s0 + $0x8] sm:$0xf]
    %v15 = vld [vmem:[%s0 + $0xc] sm:$0xff]
    %v16 = vld [vmem:[%s0 + $0x14] sm:$0xf]
    %v17 = vld [vmem:[%s0 + $0x18] sm:$0xff]
    %v18 = vld [vmem:[%s0 + $0x20] sm:$0xf]
    %v19 = vld [vmem:[%s0 + $0x24] sm:$0xff]
    %v20 = vld [vmem:[%s0 + $0x2c] sm:$0xf]
    %v21 = vld [vmem:[%s0 + $0x30] sm:$0xff]
    %v22 = vld [vmem:[%s0 + $0x38] sm:$0xf]
    %v23 = vld [vmem:[%s0 + $0x3c] sm:$0xff]
    %v24 = vld [vmem:[%s0 + $0x44] sm:$0xf]
    %v25 = vld [vmem:[%s0 + $0x48] sm:$0xff]
    %v26 = vld [vmem:[%s0 + $0x50] sm:$0xf]
    %v27 = vld [vmem:[%s0 + $0x54] sm:$0xff]
    %v28 = vld [vmem:[%s0 + $0x5c] sm:$0xf]
    %v29 = vld [vmem:[%s1] sm:$0xff]
    %v30 = vld [vmem:[%s1 + $0x8] sm:$0xf]
    %v31 = vld [vmem:[%s1 + $0xc] sm:$0xff]
    %v32 = vld [vmem:[%s1 + $0x14] sm:$0xf]
    %v33 = vld [vmem:[%s1 + $0x18] sm:$0xff]
    %v34 = vld [vmem:[%s1 + $0x20] sm:$0xf]
    %v35 = vld [vmem:[%s1 + $0x24] sm:$0xff]
    %v36 = vld [vmem:[%s1 + $0x2c] sm:$0xf]
    %v37 = vld [vmem:[%s1 + $0x30] sm:$0xff]
    %v38 = vld [vmem:[%s1 + $0x38] sm:$0xf]
    %v39 = vld [vmem:[%s1 + $0x3c] sm:$0xff]
    %v40 = vld [vmem:[%s1 + $0x44] sm:$0xf]
    %v41 = vld [vmem:[%s1 + $0x48] sm:$0xff]
    %v42 = vld [vmem:[%s1 + $0x50] sm:$0xf]
    %v43 = vld [vmem:[%s1 + $0x54] sm:$0xff]
    %v44 = vld [vmem:[%s1 + $0x5c] sm:$0xf]
    %v45 = vld [vmem:[%s1 + $0x60] sm:$0xff]
    %v46 = vld [vmem:[%s1 + $0x68] sm:$0xf]
    %v47 = vld [vmem:[%s1 + $0x6c] sm:$0xff]
    %v48 = vld [vmem:[%s1 + $0x74] sm:$0xf]
    %v49 = vld [vmem:[%s1 + $0x78] sm:$0xff]
    %v50 = vld [vmem:[%s1 + $0x80] sm:$0xf]
    %v51 = vld [vmem:[%s1 + $0x84] sm:$0xff]
    %v52 = vld [vmem:[%s1 + $0x8c] sm:$0xf]
    %v53 = vld [vmem:[%s1 + $0x90] sm:$0xff]
    %v54 = vld [vmem:[%s1 + $0x98] sm:$0xf]
    %v55 = vld [vmem:[%s1 + $0x9c] sm:$0xff]
    %v56 = vld [vmem:[%s1 + $0xa4] sm:$0xf]
    %v57 = vld [vmem:[%s1 + $0xa8] sm:$0xff]
    %v58 = vld [vmem:[%s1 + $0xb0] sm:$0xf]
    %v59 = vld [vmem:[%s1 + $0xb4] sm:$0xff]
    %v60 = vld [vmem:[%s1 + $0xbc] sm:$0xf]
    %v61 = vld [vmem:[%s1 + $0xc0] sm:$0xff]
    %v62 = vld [vmem:[%s1 + $0xc8] sm:$0xf]
    %v63 = vld [vmem:[%s1 + $0xcc] sm:$0xff]
    %v64 = vld [vmem:[%s1 + $0xd4] sm:$0xf]
    %v65 = vld [vmem:[%s1 + $0xd8] sm:$0xff]
    %v66 = vld [vmem:[%s1 + $0xe0] sm:$0xf]
    %v67 = vld [vmem:[%s1 + $0xe4] sm:$0xff]
    %v68 = vld [vmem:[%s1 + $0xec] sm:$0xf]
    %v69 = vld [vmem:[%s1 + $0xf0] sm:$0xff]
    %v70 = vld [vmem:[%s1 + $0xf8] sm:$0xf]
    %v71 = vld [vmem:[%s1 + $0xfc] sm:$0xff]
    %v72 = vld [vmem:[%s1 + $0x104] sm:$0xf]
    %v73 = vld [vmem:[%s1 + $0x108] sm:$0xff]
    %v74 = vld [vmem:[%s1 + $0x110] sm:$0xf]
    %v75 = vld [vmem:[%s1 + $0x114] sm:$0xff]
    %v76 = vld [vmem:[%s1 + $0x11c] sm:$0xf]
    %v77 = vld [vmem:[%s1 + $0x120] sm:$0xff]
    %v78 = vld [vmem:[%s1 + $0x128] sm:$0xf]
    %v95 = vunpack.c.l.b16 %v13
    %v96 = vunpack.c.h.b16 %v13
    %v97 = vunpack.c.l.b16 %v14
    %v98 = vunpack.c.l.b16 %v15
    %v99 = vunpack.c.h.b16 %v15
    %v100 = vunpack.c.l.b16 %v16
    %v101 = vunpack.c.l.b16 %v17
    %v102 = vunpack.c.h.b16 %v17
    %v103 = vunpack.c.l.b16 %v18
    %v104 = vunpack.c.l.b16 %v19
    %v105 = vunpack.c.h.b16 %v19
    %v106 = vunpack.c.l.b16 %v20
    %v107 = vunpack.c.l.b16 %v21
    %v108 = vunpack.c.h.b16 %v21
    %v109 = vunpack.c.l.b16 %v22
    %v110 = vunpack.c.l.b16 %v23
    %v111 = vunpack.c.h.b16 %v23
    %v112 = vunpack.c.l.b16 %v24
    %v113 = vunpack.c.l.b16 %v25
    %v114 = vunpack.c.h.b16 %v25
    %v115 = vunpack.c.l.b16 %v26
    %v116 = vunpack.c.l.b16 %v27
    %v117 = vunpack.c.h.b16 %v27
    %v118 = vunpack.c.l.b16 %v28
    %v119 = vpack.c.b16 %v98, %v95
    %v120 = vpack.c.b16 %v99, %v96
    %v121 = vpack.c.b16 %v100, %v97
    %v122 = vpack.c.b16 %v104, %v101
    %v123 = vpack.c.b16 %v105, %v102
    %v124 = vpack.c.b16 %v106, %v103
    %v125 = vpack.c.b16 %v110, %v107
    %v126 = vpack.c.b16 %v111, %v108
    %v127 = vpack.c.b16 %v112, %v109
    %v128 = vpack.c.b16 %v116, %v113
    %v129 = vpack.c.b16 %v117, %v114
    %v130 = vpack.c.b16 %v118, %v115
    %v189 = vunpack.c.l.b16 %v29
    %v190 = vunpack.c.h.b16 %v29
    %v191 = vunpack.c.l.b16 %v30
    %v192 = vunpack.c.l.b16 %v31
    %v193 = vunpack.c.h.b16 %v31
    %v194 = vunpack.c.l.b16 %v32
    %v195 = vunpack.c.l.b16 %v33
    %v196 = vunpack.c.h.b16 %v33
    %v197 = vunpack.c.l.b16 %v34
    %v198 = vunpack.c.l.b16 %v35
    %v199 = vunpack.c.h.b16 %v35
    %v200 = vunpack.c.l.b16 %v36
    %v201 = vunpack.c.l.b16 %v37
    %v202 = vunpack.c.h.b16 %v37
    %v203 = vunpack.c.l.b16 %v38
    %v204 = vunpack.c.l.b16 %v39
    %v205 = vunpack.c.h.b16 %v39
    %v206 = vunpack.c.l.b16 %v40
    %v207 = vunpack.c.l.b16 %v41
    %v208 = vunpack.c.h.b16 %v41
    %v209 = vunpack.c.l.b16 %v42
    %v210 = vunpack.c.l.b16 %v43
    %v211 = vunpack.c.h.b16 %v43
    %v212 = vunpack.c.l.b16 %v44
    %v213 = vunpack.c.l.b16 %v45
    %v214 = vunpack.c.h.b16 %v45
    %v215 = vunpack.c.l.b16 %v46
    %v216 = vunpack.c.l.b16 %v47
    %v217 = vunpack.c.h.b16 %v47
    %v218 = vunpack.c.l.b16 %v48
    %v219 = vunpack.c.l.b16 %v49
    %v220 = vunpack.c.h.b16 %v49
    %v221 = vunpack.c.l.b16 %v50
    %v222 = vunpack.c.l.b16 %v51
    %v223 = vunpack.c.h.b16 %v51
    %v224 = vunpack.c.l.b16 %v52
    %v225 = vunpack.c.l.b16 %v53
    %v226 = vunpack.c.h.b16 %v53
    %v227 = vunpack.c.l.b16 %v54
    %v228 = vunpack.c.l.b16 %v55
    %v229 = vunpack.c.h.b16 %v55
    %v230 = vunpack.c.l.b16 %v56
    %v231 = vunpack.c.l.b16 %v57
    %v232 = vunpack.c.h.b16 %v57
    %v233 = vunpack.c.l.b16 %v58
    %v234 = vunpack.c.l.b16 %v59
    %v235 = vunpack.c.h.b16 %v59
    %v236 = vunpack.c.l.b16 %v60
    %v237 = vunpack.c.l.b16 %v61
    %v238 = vunpack.c.h.b16 %v61
    %v239 = vunpack.c.l.b16 %v62
    %v240 = vunpack.c.l.b16 %v63
    %v241 = vunpack.c.h.b16 %v63
    %v242 = vunpack.c.l.b16 %v64
    %v243 = vunpack.c.l.b16 %v65
    %v244 = vunpack.c.h.b16 %v65
    %v245 = vunpack.c.l.b16 %v66
    %v246 = vunpack.c.l.b16 %v67
    %v247 = vunpack.c.h.b16 %v67
    %v248 = vunpack.c.l.b16 %v68
    %v249 = vunpack.c.l.b16 %v69
    %v250 = vunpack.c.h.b16 %v69
    %v251 = vunpack.c.l.b16 %v70
    %v252 = vunpack.c.l.b16 %v71
    %v253 = vunpack.c.h.b16 %v71
    %v254 = vunpack.c.l.b16 %v72
    %v255 = vunpack.c.l.b16 %v73
    %v256 = vunpack.c.h.b16 %v73
    %v257 = vunpack.c.l.b16 %v74
    %v258 = vunpack.c.l.b16 %v75
    %v259 = vunpack.c.h.b16 %v75
    %v260 = vunpack.c.l.b16 %v76
    %v261 = vunpack.c.l.b16 %v77
    %v262 = vunpack.c.h.b16 %v77
    %v263 = vunpack.c.l.b16 %v78
    %v264 = vpack.c.b16 %v192, %v189
    %v265 = vpack.c.b16 %v193, %v190
    %v266 = vpack.c.b16 %v194, %v191
    %v267 = vpack.c.b16 %v198, %v195
    %v268 = vpack.c.b16 %v199, %v196
    %v269 = vpack.c.b16 %v200, %v197
    %v270 = vpack.c.b16 %v204, %v201
    %v271 = vpack.c.b16 %v205, %v202
    %v272 = vpack.c.b16 %v206, %v203
    %v273 = vpack.c.b16 %v210, %v207
    %v274 = vpack.c.b16 %v211, %v208
    %v275 = vpack.c.b16 %v212, %v209
    %v276 = vpack.c.b16 %v216, %v213
    %v277 = vpack.c.b16 %v217, %v214
    %v278 = vpack.c.b16 %v218, %v215
    %v279 = vpack.c.b16 %v222, %v219
    %v280 = vpack.c.b16 %v223, %v220
    %v281 = vpack.c.b16 %v224, %v221
    %v282 = vpack.c.b16 %v228, %v225
    %v283 = vpack.c.b16 %v229, %v226
    %v284 = vpack.c.b16 %v230, %v227
    %v285 = vpack.c.b16 %v234, %v231
    %v286 = vpack.c.b16 %v235, %v232
    %v287 = vpack.c.b16 %v236, %v233
    %v288 = vpack.c.b16 %v240, %v237
    %v289 = vpack.c.b16 %v241, %v238
    %v290 = vpack.c.b16 %v242, %v239
    %v291 = vpack.c.b16 %v246, %v243
    %v292 = vpack.c.b16 %v247, %v244
    %v293 = vpack.c.b16 %v248, %v245
    %v294 = vpack.c.b16 %v252, %v249
    %v295 = vpack.c.b16 %v253, %v250
    %v296 = vpack.c.b16 %v254, %v251
    %v297 = vpack.c.b16 %v258, %v255
    %v298 = vpack.c.b16 %v259, %v256
    %v299 = vpack.c.b16 %v260, %v257
    %v300 = vpack.c.b16 %v261, %v261
    %v301 = vpack.c.b16 %v262, %v262
    %v302 = vpack.c.b16 %v263, %v263
    %vm329 = vcmask 359424
    %v331 = vsel %vm329, %v121, 0
    %v334 = vsel %vm329, %v124, 0
    %v337 = vsel %vm329, %v127, 0
    %v340 = vsel %vm329, %v130, 0
    %v343 = vsel %vm329, %v266, 0
    %v346 = vsel %vm329, %v269, 0
    %v349 = vsel %vm329, %v272, 0
    %v352 = vsel %vm329, %v275, 0
    %v355 = vsel %vm329, %v278, 0
    %v358 = vsel %vm329, %v281, 0
    %v361 = vsel %vm329, %v284, 0
    %v364 = vsel %vm329, %v287, 0
    %v367 = vsel %vm329, %v290, 0
    %v370 = vsel %vm329, %v293, 0
    %v373 = vsel %vm329, %v296, 0
    %v376 = vsel %vm329, %v299, 0
    %v379 = vsel %vm329, %v302, 0
    %381 = vmatprep.subr.bf16.mxu0 %v286
    %382 = vmatpush1.bf16.xpose.msra.mxu0 %v285
    %383 = vmatprep.subr.bf16.mxu0 %v283
    %384 = vmatpush1.bf16.xpose.msra.mxu0 %v282
    %385 = vmatprep.subr.bf16.mxu0 %v280
    %386 = vmatpush1.bf16.xpose.msra.mxu0 %v279
    %387 = vmatprep.subr.bf16.mxu0 %v277
    %388 = vmatpush1.bf16.xpose.msra.mxu0 %v276
    %389 = vmatprep.subr.bf16.mxu0 %v274
    %390 = vmatpush1.bf16.xpose.msra.mxu0 %v273
    %391 = vmatprep.subr.bf16.mxu0 %v271
    %392 = vmatpush1.bf16.xpose.msra.mxu0 %v270
    %393 = vmatprep.subr.bf16.mxu0 %v268
    %394 = vmatpush1.bf16.xpose.msra.mxu0 %v267
    %395 = vmatprep.subr.bf16.mxu0 %v265
    %396 = vmatpush1.bf16.xpose.msra.mxu0 %v264
    %397 = vmatprep.subr.bf16.mxu0 0
    %398 = vmatpush2.bf16.xpose.msra.mxu0 0
    %399 = vmatprep.subr.bf16.mxu0 0
    %400 = vmatpush2.bf16.xpose.msra.mxu0 0
    %401 = vmatprep.subr.bf16.mxu0 0
    %402 = vmatpush2.bf16.xpose.msra.mxu0 0
    %403 = vmatprep.subr.bf16.mxu0 %v301
    %404 = vmatpush2.bf16.xpose.msra.mxu0 %v300
    %405 = vmatprep.subr.bf16.mxu0 %v298
    %406 = vmatpush2.bf16.xpose.msra.mxu0 %v297
    %407 = vmatprep.subr.bf16.mxu0 %v295
    %408 = vmatpush2.bf16.xpose.msra.mxu0 %v294
    %409 = vmatprep.subr.bf16.mxu0 %v292
    %410 = vmatpush2.bf16.xpose.msra.mxu0 %v291
    %411 = vmatprep.subr.bf16.mxu0 %v289
    %412 = vmatpush2.bf16.xpose.msra.mxu0 %v288
    %413 = vmatprep.mubr.bf16.mxu0 %v120
    %414 = vmatmul.mubr.bf16.gmra.mxu0 %v119
    %v415 = vpop.f32.mrf.mxu0
    %v416 = vadd.f32 0.0, %v415
    %v417 = vpop.f32.mrf.mxu0
    %v418 = vadd.f32 0.0, %v417
    %v419 = vpop.f32.mrf.mxu0
    %v420 = vadd.f32 0.0, %v419
    %v421 = vpop.f32.mrf.mxu0
    %v422 = vadd.f32 0.0, %v421
    %423 = vmatprep.mubr.bf16.mxu0 %v123
    %424 = vmatmul.mubr.bf16.gmra.mxu0 %v122
    %v425 = vpop.f32.mrf.mxu0
    %v426 = vadd.f32 0.0, %v425
    %v427 = vpop.f32.mrf.mxu0
    %v428 = vadd.f32 0.0, %v427
    %v429 = vpop.f32.mrf.mxu0
    %v430 = vadd.f32 0.0, %v429
    %v431 = vpop.f32.mrf.mxu0
    %v432 = vadd.f32 0.0, %v431
    %433 = vmatprep.mubr.bf16.mxu0 %v126
    %434 = vmatmul.mubr.bf16.gmra.mxu0 %v125
    %v435 = vpop.f32.mrf.mxu0
    %v436 = vadd.f32 0.0, %v435
    %v437 = vpop.f32.mrf.mxu0
    %v438 = vadd.f32 0.0, %v437
    %v439 = vpop.f32.mrf.mxu0
    %v440 = vadd.f32 0.0, %v439
    %v441 = vpop.f32.mrf.mxu0
    %v442 = vadd.f32 0.0, %v441
    %443 = vmatprep.mubr.bf16.mxu0 %v129
    %444 = vmatmul.mubr.bf16.gmra.mxu0 %v128
    %v445 = vpop.f32.mrf.mxu0
    %v446 = vadd.f32 0.0, %v445
    %v447 = vpop.f32.mrf.mxu0
    %v448 = vadd.f32 0.0, %v447
    %v449 = vpop.f32.mrf.mxu0
    %v450 = vadd.f32 0.0, %v449
    %v451 = vpop.f32.mrf.mxu0
    %v452 = vadd.f32 0.0, %v451
    %453 = vdwg.mxu0
    %454 = vmatprep.subr.bf16.mxu0 0
    %455 = vmatpush1.bf16.xpose.msra.mxu0 %v364
    %456 = vmatprep.subr.bf16.mxu0 0
    %457 = vmatpush1.bf16.xpose.msra.mxu0 %v361
    %458 = vmatprep.subr.bf16.mxu0 0
    %459 = vmatpush1.bf16.xpose.msra.mxu0 %v358
    %460 = vmatprep.subr.bf16.mxu0 0
    %461 = vmatpush1.bf16.xpose.msra.mxu0 %v355
    %462 = vmatprep.subr.bf16.mxu0 0
    %463 = vmatpush1.bf16.xpose.msra.mxu0 %v352
    %464 = vmatprep.subr.bf16.mxu0 0
    %465 = vmatpush1.bf16.xpose.msra.mxu0 %v349
    %466 = vmatprep.subr.bf16.mxu0 0
    %467 = vmatpush1.bf16.xpose.msra.mxu0 %v346
    %468 = vmatprep.subr.bf16.mxu0 0
    %469 = vmatpush1.bf16.xpose.msra.mxu0 %v343
    %470 = vmatprep.subr.bf16.mxu0 0
    %471 = vmatpush2.bf16.xpose.msra.mxu0 0
    %472 = vmatprep.subr.bf16.mxu0 0
    %473 = vmatpush2.bf16.xpose.msra.mxu0 0
    %474 = vmatprep.subr.bf16.mxu0 0
    %475 = vmatpush2.bf16.xpose.msra.mxu0 0
    %476 = vmatprep.subr.bf16.mxu0 0
    %477 = vmatpush2.bf16.xpose.msra.mxu0 %v379
    %478 = vmatprep.subr.bf16.mxu0 0
    %479 = vmatpush2.bf16.xpose.msra.mxu0 %v376
    %480 = vmatprep.subr.bf16.mxu0 0
    %481 = vmatpush2.bf16.xpose.msra.mxu0 %v373
    %482 = vmatprep.subr.bf16.mxu0 0
    %483 = vmatpush2.bf16.xpose.msra.mxu0 %v370
    %484 = vmatprep.subr.bf16.mxu0 0
    %485 = vmatpush2.bf16.xpose.msra.mxu0 %v367
    %486 = vmatprep.mubr.bf16.mxu0 0
    %487 = vmatmul.mubr.bf16.gmra.mxu0 %v331
    %v488 = vpop.f32.mrf.mxu0
    %v489 = vadd.f32 %v416, %v488
    %v490 = vpop.f32.mrf.mxu0
    %v491 = vadd.f32 %v418, %v490
    %v492 = vpop.f32.mrf.mxu0
    %v493 = vadd.f32 %v420, %v492
    %v494 = vpop.f32.mrf.mxu0
    %v495 = vadd.f32 %v422, %v494
    %496 = vmatprep.mubr.bf16.mxu0 0
    %497 = vmatmul.mubr.bf16.gmra.mxu0 %v334
    %v498 = vpop.f32.mrf.mxu0
    %v499 = vadd.f32 %v426, %v498
    %v500 = vpop.f32.mrf.mxu0
    %v501 = vadd.f32 %v428, %v500
    %v502 = vpop.f32.mrf.mxu0
    %v503 = vadd.f32 %v430, %v502
    %v504 = vpop.f32.mrf.mxu0
    %v505 = vadd.f32 %v432, %v504
    %506 = vmatprep.mubr.bf16.mxu0 0
    %507 = vmatmul.mubr.bf16.gmra.mxu0 %v337
    %v508 = vpop.f32.mrf.mxu0
    %v509 = vadd.f32 %v436, %v508
    %v510 = vpop.f32.mrf.mxu0
    %v511 = vadd.f32 %v438, %v510
    %v512 = vpop.f32.mrf.mxu0
    %v513 = vadd.f32 %v440, %v512
    %v514 = vpop.f32.mrf.mxu0
    %v515 = vadd.f32 %v442, %v514
    %516 = vmatprep.mubr.bf16.mxu0 0
    %517 = vmatmul.mubr.bf16.gmra.mxu0 %v340
    %v518 = vpop.f32.mrf.mxu0
    %v519 = vadd.f32 %v446, %v518
    %v520 = vpop.f32.mrf.mxu0
    %v521 = vadd.f32 %v448, %v520
    %v522 = vpop.f32.mrf.mxu0
    %v523 = vadd.f32 %v450, %v522
    %v524 = vpop.f32.mrf.mxu0
    %v525 = vadd.f32 %v452, %v524
    %526 = vdwg.mxu0
    %527 = vst [vmem:[#allocation2] sm:$0xff] %v489
    %vm528 = vcmask 588800
    %529 = vst.msk [vmem:[#allocation2 + $0x8] sm:$0xff] %vm528, %v491
    %530 = vst [vmem:[#allocation2 + $0x10] sm:$0xff] %v493
    %531 = vst.msk [vmem:[#allocation2 + $0x18] sm:$0xff] %vm528, %v495
    %532 = vst [vmem:[#allocation2 + $0x20] sm:$0xff] %v499
    %533 = vst.msk [vmem:[#allocation2 + $0x28] sm:$0xff] %vm528, %v501
    %534 = vst [vmem:[#allocation2 + $0x30] sm:$0xff] %v503
    %535 = vst.msk [vmem:[#allocation2 + $0x38] sm:$0xff] %vm528, %v505
    %536 = vst [vmem:[#allocation2 + $0x40] sm:$0xff] %v509
    %537 = vst.msk [vmem:[#allocation2 + $0x48] sm:$0xff] %vm528, %v511
    %538 = vst [vmem:[#allocation2 + $0x50] sm:$0xff] %v513
    %539 = vst.msk [vmem:[#allocation2 + $0x58] sm:$0xff] %vm528, %v515
    %540 = vst [vmem:[#allocation2 + $0x60] sm:$0xff] %v519
    %541 = vst.msk [vmem:[#allocation2 + $0x68] sm:$0xff] %vm528, %v521
    %542 = vst [vmem:[#allocation2 + $0x70] sm:$0xff] %v523
    %543 = vst.msk [vmem:[#allocation2 + $0x78] sm:$0xff] %vm528, %v525
    // Predicated region
    $region10: #{plants_linear_forward.1} parent=1 // pred_check
      _
    $region11: #{plants_linear_forward.1} parent=1 // pred_check_branch
      %545 = sbr.rel (0) target = $region13
    $region12: #{plants_linear_forward.1} parent=1 // pred_region
      %s547 = ssub.s32 2048, 2048
      %548 = vsyncadd [#allocation3], %s547
      %s549 = sshll.u32 [#allocation2], 4
      %s550 = int_to_ptr.vmem [resolvable:$true] %s549
      %555 = dma.vmem_to_hbm [thread:$0]  %s550, 2048, %s2, [#allocation3], 256, 256, 16
    $region13: #{plants_linear_forward.1} parent=1 // pred_fallthru
      _
    // Predicated region
    $region14: #{plants_linear_forward.1} parent=1 // pred_check
      _
    $region15: #{plants_linear_forward.1} parent=1 // pred_check_branch
      %557 = sbr.rel (0) target = $region17
    $region16: #{plants_linear_forward.1} parent=1 // pred_region
      %558 = dma.done [#allocation3], 2048
    $region17: #{plants_linear_forward.1} parent=1 // pred_fallthru
      _
    %559 = vsyncpa [#allocation3], 1

</llo_original>
